<compile_context>
chip_gen: v7x
topology: tpu7x:2x2x1
jax: 0.10.0
libtpu: 0.0.40
codegen_flags: <defaults>
</compile_context>

<pallas_src>
import functools

import jax
import jax.numpy as jnp
from jax import lax
from jax.experimental import pallas as pl
from jax.experimental.pallas import tpu as pltpu


def _ntxent_kernel(rows_ref, partner_ref, keys_ref, out_ref, *,
                   batch_size, row_tile, inv_temperature, mm_dtype):
    two_n = 2 * batch_size
    tq = row_tile
    inv_t = jnp.float32(inv_temperature)

    rows = rows_ref[...]          # (tq, D)  f32, L2-normalized in the wrapper
    partner = partner_ref[...]    # (tq, D)  f32, partner rows rep[(g+N) mod 2N]
    keys = keys_ref[...]          # (2N, D)  mm_dtype, resident across the grid

    # One fused Gram tile: (tq, 2N) with f32 accumulation on the MXU.
    # 1/T is folded into the LHS (O(tq*D)) before the cast.
    lhs = (rows * inv_t).astype(mm_dtype)
    sim = lax.dot_general(lhs, keys, (((1,), (1,)), ((), ())),
                          preferred_element_type=jnp.float32)

    # Positive logit as a row-wise f32 VPU dot (slightly more precise than the
    # bf16 matmul copy of the same entry that stays inside the LSE — benign).
    positive = jnp.sum(rows * partner, axis=-1, keepdims=True) * inv_t

    # Mask only the self-similarity column (global diagonal).  The partner
    # column stays inside the LSE, which is exactly CE([positive, negatives], 0).
    row_off = pl.program_id(0) * tq
    g = row_off + lax.broadcasted_iota(jnp.int32, (tq, 1), 0)
    col = lax.broadcasted_iota(jnp.int32, (1, two_n), 1)
    sim = jnp.where(col == g, jnp.float32(-1e30), sim)

    # Single logsumexp pass over the fused (tq, 2N) tile.
    m = jnp.max(sim, axis=-1, keepdims=True)
    se = jnp.sum(jnp.exp(sim - m), axis=-1, keepdims=True)
    ce = m + jnp.log(se) - positive                         # (tq, 1)

    # Per-tile partial sum: 4-byte writeback per grid step.
    out_ref[0] = jnp.sum(ce, keepdims=True)                 # (1, 1)


def _vmem_capacity_bytes():
    """Detected per-core VMEM capacity; conservative v7x fallback (64 MiB)."""
    try:
        cap = getattr(pltpu.get_tpu_info(), "vmem_capacity_bytes", None)
        if cap:
            return int(cap)
    except Exception:
        pass
    return 64 * 1024 * 1024


def _pick_row_tile(two_n, d, mm_bytes, vmem_bytes):
    """Largest row tile whose full VMEM footprint fits the detected capacity.

    Accounts for: resident normalized keys (assume 2 buffers), double-buffered
    row/partner f32 blocks, ~3 (tq, 2N) f32 similarity temporaries and the
    cast LHS.  Candidates prefer multiples of 256 (v6e/v7x MXU row fill)."""
    budget = int(vmem_bytes * 0.75)
    resident = 2 * two_n * d * mm_bytes

    def fits(t):
        io = 2 * 2 * t * d * 4                  # rows + partner, 2 buffers each
        tmp = 3 * t * two_n * 4 + t * d * mm_bytes
        return resident + io + tmp <= budget

    if two_n <= 1024 and fits(two_n):
        return two_n                            # single tile: one fused matmul
    for cand in (2048, 1024, 512, 256, 128, 64, 32, 16, 8):
        if two_n % cand == 0 and fits(cand):
            return cand
    # TODO(synk): key-tiling path instead of this single-tile fallback.
    return two_n


def ntxent_loss(zis, zjs, *, temperature=0.5, high_precision=False, row_tile=None):
    """NT-Xent loss.  zis, zjs: (N, D).  Returns scalar float32 loss."""
    assert zis.shape == zjs.shape and zis.ndim == 2
    n, d = zis.shape
    two_n = 2 * n

    mm_dtype = jnp.float32 if high_precision else jnp.bfloat16
    mm_bytes = 4 if high_precision else 2

    # Hoisted L2 normalization (runs once; eps matches torch CosineSimilarity).
    def l2n(x):
        x = x.astype(jnp.float32)
        ss = jnp.sum(x * x, axis=-1, keepdims=True)
        return x * lax.rsqrt(jnp.maximum(ss, jnp.float32(1e-16)))

    zjs_n = l2n(zjs)
    zis_n = l2n(zis)
    rep_n = jnp.concatenate([zjs_n, zis_n], axis=0)     # rows / key order
    partner = jnp.concatenate([zis_n, zjs_n], axis=0)   # partner[g] = rep[(g+N)%2N]
    keys = rep_n.astype(mm_dtype)                       # resident VMEM keys

    vmem_cap = _vmem_capacity_bytes()
    if row_tile is not None:
        tq = int(row_tile)
        assert two_n % tq == 0 and (tq == two_n or tq % 8 == 0)
    else:
        tq = _pick_row_tile(two_n, d, mm_bytes, vmem_cap)
    num_tiles = two_n // tq

    kernel = functools.partial(
        _ntxent_kernel, batch_size=n, row_tile=tq,
        inv_temperature=1.0 / float(temperature), mm_dtype=mm_dtype)

    per_tile = pl.pallas_call(
        kernel,
        out_shape=jax.ShapeDtypeStruct((num_tiles, 1, 1), jnp.float32),
        grid_spec=pltpu.PrefetchScalarGridSpec(
            num_scalar_prefetch=0,
            grid=(num_tiles,),
            in_specs=[
                pl.BlockSpec((tq, d), lambda i: (i, 0)),      # rows (f32)
                pl.BlockSpec((tq, d), lambda i: (i, 0)),      # partners (f32)
                pl.BlockSpec((two_n, d), lambda i: (0, 0)),   # keys, resident
            ],
            out_specs=pl.BlockSpec((1, 1, 1), lambda i: (i, 0, 0)),
        ),
        compiler_params=pltpu.CompilerParams(
            dimension_semantics=("parallel",),     # independent row tiles
            vmem_limit_bytes=int(vmem_cap * 0.9),
        ),
    )(rep_n, partner, keys)
    return jnp.sum(per_tile) / jnp.float32(two_n)


def _ntxent_loss_ref(zis, zjs, *, temperature=0.5):
    """Pure-JAX reference mirroring the PyTorch module exactly."""
    n = zis.shape[0]
    rep = jnp.concatenate([zjs, zis], axis=0).astype(jnp.float32)
    norm = jnp.maximum(jnp.linalg.norm(rep, axis=-1, keepdims=True), 1e-8)
    rn = rep / norm
    sim = jnp.matmul(rn, rn.T, precision=lax.Precision.HIGHEST)
    two_n = 2 * n
    l_pos = jnp.diagonal(sim, offset=n)
    r_pos = jnp.diagonal(sim, offset=-n)
    positives = jnp.concatenate([l_pos, r_pos]).reshape(two_n, 1)
    eye0 = jnp.eye(two_n, dtype=bool)
    eye_p = jnp.eye(two_n, k=n, dtype=bool)
    eye_m = jnp.eye(two_n, k=-n, dtype=bool)
    keep = ~(eye0 | eye_p | eye_m)
    negatives = sim[keep].reshape(two_n, two_n - 2)
    logits = jnp.concatenate([positives, negatives], axis=1) / temperature
    lse = jax.scipy.special.logsumexp(logits, axis=-1)
    loss = jnp.sum(lse - logits[:, 0])
    return loss / two_n


if __name__ == "__main__":
    key = jax.random.PRNGKey(0)
    k1, k2, k3, k4 = jax.random.split(key, 4)

    # Small shape (batch=4, hidden=32) — single-tile path (2N == 8).
    zis = jax.random.normal(k1, (4, 32), dtype=jnp.float32)
    zjs = jax.random.normal(k2, (4, 32), dtype=jnp.float32)
    ref = _ntxent_loss_ref(zis, zjs, temperature=0.5)

    loss_hp = jax.jit(functools.partial(
        ntxent_loss, temperature=0.5, high_precision=True))(zis, zjs)
    jax.block_until_ready(loss_hp)
    assert jnp.allclose(loss_hp, ref, rtol=1e-5, atol=1e-5), (loss_hp, ref)

    loss_bf = jax.jit(functools.partial(ntxent_loss, temperature=0.5))(zis, zjs)
    jax.block_until_ready(loss_bf)
    assert jnp.allclose(loss_bf, ref, rtol=2e-2, atol=2e-2), (loss_bf, ref)

    # Row-tiled path (batch=256, hidden=128, forced tq=128 → 4 grid steps).
    zis_b = jax.random.normal(k3, (256, 128), dtype=jnp.float32)
    zjs_b = jax.random.normal(k4, (256, 128), dtype=jnp.float32)
    ref_b = _ntxent_loss_ref(zis_b, zjs_b, temperature=0.5)

    loss_b_hp = jax.jit(functools.partial(
        ntxent_loss, temperature=0.5, high_precision=True, row_tile=128))(zis_b, zjs_b)
    jax.block_until_ready(loss_b_hp)
    assert jnp.allclose(loss_b_hp, ref_b, rtol=1e-4, atol=1e-4), (loss_b_hp, ref_b)

    loss_b_bf = jax.jit(functools.partial(
        ntxent_loss, temperature=0.5, row_tile=128))(zis_b, zjs_b)
    jax.block_until_ready(loss_b_bf)
    assert jnp.allclose(loss_b_bf, ref_b, rtol=2e-2, atol=2e-2), (loss_b_bf, ref_b)

    print("KERNEL_OK")
</pallas_src>

<mosaic_0001>
module attributes {stable_mosaic.version = 11 : i64} {
  func.func @_ntxent_kernel(%arg0: i32, %arg1: memref<8x32xf32, #tpu.memory_space<vmem>>, %arg2: memref<8x32xf32, #tpu.memory_space<vmem>>, %arg3: memref<8x32xf32, #tpu.memory_space<vmem>>, %arg4: memref<1x1x1xf32, #tpu.memory_space<vmem>>) attributes {dimension_semantics = [#tpu.dimension_semantics<parallel>], iteration_bounds = array<i64: 1>, scalar_prefetch = 0 : i64, scratch_operands = 0 : i64, tpu.core_type = #tpu.core_type<tc>, window_params = [{transform_indices = @transform_0, window_bounds = array<i64: 8, 32>}, {transform_indices = @transform_1, window_bounds = array<i64: 8, 32>}, {pipeline_mode = #tpu.pipeline_mode<synchronous>, transform_indices = @transform_2, window_bounds = array<i64: 8, 32>}, {transform_indices = @transform_3, window_bounds = array<i64: 1, 1, 1>}]} {
    %c0 = arith.constant 0 : index
    %c0_0 = arith.constant 0 : index
    %0 = vector.load %arg1[%c0, %c0_0] : memref<8x32xf32, #tpu.memory_space<vmem>>, vector<8x32xf32>
    %c0_1 = arith.constant 0 : index
    %c0_2 = arith.constant 0 : index
    %1 = vector.load %arg2[%c0_1, %c0_2] : memref<8x32xf32, #tpu.memory_space<vmem>>, vector<8x32xf32>
    %c0_3 = arith.constant 0 : index
    %c0_4 = arith.constant 0 : index
    %2 = vector.load %arg3[%c0_3, %c0_4] : memref<8x32xf32, #tpu.memory_space<vmem>>, vector<8x32xf32>
    %cst = arith.constant 2.000000e+00 : f32
    %3 = vector.broadcast %cst : f32 to vector<8x32xf32>
    %4 = arith.mulf %0, %3 : vector<8x32xf32>
    %cst_5 = arith.constant dense<0.000000e+00> : vector<8x8xf32>
    %5 = tpu.matmul %4, %2, %cst_5 {dimension_numbers = #tpu.dot_dimension_numbers<[1], [1], [0], [0], [0, 0, 1, 0], [], []>} : vector<8x32xf32>, vector<8x32xf32>, vector<8x8xf32> -> vector<8x8xf32>
    %6 = arith.mulf %0, %1 : vector<8x32xf32>
    %cst_6 = arith.constant dense<0.000000e+00> : vector<8xf32>
    %7 = vector.multi_reduction <add>, %6, %cst_6 [1] : vector<8x32xf32> to vector<8xf32>
    %8 = vector.shape_cast %7 : vector<8xf32> to vector<8x1xf32>
    %cst_7 = arith.constant 2.000000e+00 : f32
    %9 = vector.broadcast %cst_7 : f32 to vector<8x1xf32>
    %10 = arith.mulf %8, %9 : vector<8x1xf32>
    %c8_i32 = arith.constant 8 : i32
    %11 = arith.muli %arg0, %c8_i32 : i32
    %12 = tpu.iota {dimensions = array<i32: 0>} : vector<8x1xi32>
    %13 = vector.broadcast %11 : i32 to vector<8x1xi32>
    %14 = arith.addi %13, %12 : vector<8x1xi32>
    %15 = tpu.iota {dimensions = array<i32: 1>} : vector<1x8xi32>
    %16 = vector.broadcast %15 : vector<1x8xi32> to vector<8x8xi32>
    %17 = vector.broadcast %14 : vector<8x1xi32> to vector<8x8xi32>
    %18 = arith.cmpi eq, %16, %17 : vector<8x8xi32>
    %cst_8 = arith.constant -1.000000e+30 : f32
    %19 = vector.broadcast %cst_8 : f32 to vector<8x8xf32>
    %20 = arith.select %18, %19, %5 : vector<8x8xi1>, vector<8x8xf32>
    %cst_9 = arith.constant dense<0xFF800000> : vector<8xf32>
    %21 = vector.multi_reduction <maximumf>, %20, %cst_9 [1] : vector<8x8xf32> to vector<8xf32>
    %22 = vector.shape_cast %21 : vector<8xf32> to vector<8x1xf32>
    %23 = vector.broadcast %22 : vector<8x1xf32> to vector<8x8xf32>
    %24 = arith.subf %20, %23 : vector<8x8xf32>
    %25 = math.exp %24 : vector<8x8xf32>
    %cst_10 = arith.constant dense<0.000000e+00> : vector<8xf32>
    %26 = vector.multi_reduction <add>, %25, %cst_10 [1] : vector<8x8xf32> to vector<8xf32>
    %27 = vector.shape_cast %26 : vector<8xf32> to vector<8x1xf32>
    %28 = math.log %27 : vector<8x1xf32>
    %29 = arith.addf %22, %28 : vector<8x1xf32>
    %30 = arith.subf %29, %10 : vector<8x1xf32>
    %31 = vector.shape_cast %30 : vector<8x1xf32> to vector<1x8x1xf32>
    %cst_11 = arith.constant dense<0.000000e+00> : vector<1xf32>
    %32 = vector.multi_reduction <add>, %31, %cst_11 [1, 2] : vector<1x8x1xf32> to vector<1xf32>
    %33 = vector.shape_cast %32 : vector<1xf32> to vector<1x1x1xf32>
    %34 = vector.extract %33[0, 0, 0] : f32 from vector<1x1x1xf32>
    %35 = vector.broadcast %34 : f32 to vector<1x1xf32>
    %c0_12 = arith.constant 0 : index
    %c0_13 = arith.constant 0 : index
    %c0_14 = arith.constant 0 : index
    %36 = vector.load %arg4[%c0_12, %c0_13, %c0_14] : memref<1x1x1xf32, #tpu.memory_space<vmem>>, vector<1x1x1xf32>
    %37 = vector.shape_cast %36 : vector<1x1x1xf32> to vector<1x1xf32>
    %38 = vector.shape_cast %35 : vector<1x1xf32> to vector<1x1x1xf32>
    tpu.vector_store %arg4[%c0_12, %c0_13, %c0_14], %38 {strides = array<i32>} : memref<1x1x1xf32, #tpu.memory_space<vmem>>, vector<1x1x1xf32>,
    return
  }
  func.func @transform_0(%arg0: i32) -> (i32, i32) {
    %c0_i32 = arith.constant 0 : i32
    %c0_i32_0 = arith.constant 0 : i32
    return %arg0, %c0_i32 : i32, i32
  }
  func.func @transform_1(%arg0: i32) -> (i32, i32) {
    %c0_i32 = arith.constant 0 : i32
    %c0_i32_0 = arith.constant 0 : i32
    return %arg0, %c0_i32 : i32, i32
  }
  func.func @transform_2(%arg0: i32) -> (i32, i32) {
    %c0_i32 = arith.constant 0 : i32
    %c0_i32_0 = arith.constant 0 : i32
    %c0_i32_1 = arith.constant 0 : i32
    return %c0_i32, %c0_i32_0 : i32, i32
  }
  func.func @transform_3(%arg0: i32) -> (i32, i32, i32) {
    %c0_i32 = arith.constant 0 : i32
    %c0_i32_0 = arith.constant 0 : i32
    %c0_i32_1 = arith.constant 0 : i32
    return %arg0, %c0_i32, %c0_i32_0 : i32, i32, i32
  }
}

</mosaic_0001>

<llo_original>
// kernel: ntxent_loss.1
$region0: #{ntxent_loss.1}
  #allocation0 [shape = 'u32[]', space=smem, size = 0x4, offset = 0x4, fixed_abs, tag = 'smem constant byte address 0x4 - core index']
  #allocation1 [shape = 'u32[144,128]{1,0:T(1,128)}', space=vmem, size = 0x12000, scoped, tag = 'internal scratch']
  %s0 = inlined_call_operand.vmem [shape: f32[8,32], index: 0, kind: input, shape index: {}, may-alias: {0,2}]
  %s1 = inlined_call_operand.vmem [shape: f32[8,32], index: 1, kind: input, shape index: {}]
  %s2 = inlined_call_operand.vmem [shape: f32[8,32], index: 2, kind: input, shape index: {}, may-alias: {0,2}]
  %s3 = inlined_call_operand.hbm [shape: f32[1,1,1], index: 3, kind: output, shape index: {}]
  %s4 = sld [smem:[#allocation0]]
  $region22: #{ntxent_loss.1} parent=0
    _
  %s6 = ssub.s32 1, %s4
  %s7 = scalar_select 0, %s6, %s4
  $region1: #{ntxent_loss.1} parent=0
    #allocation2 [shape = 'u8[512]{0}', space=vmem, size = 0x400, scoped, tag = 'output window, operand 0, single buffered']
    #allocation3 [shape = 's32[1]{0}', space=sflag, size = 0x4, scoped, tag = 'scoped memory for ntxent_loss.1']
    %8 = vsyncpa [#allocation3], 0
    // Predicated region
    $region2: #{ntxent_loss.1} parent=1 // pred_check
      _
    $region3: #{ntxent_loss.1} parent=1 // pred_check_branch
      %10 = sbr.rel (0) target = $region5
    $region4: #{ntxent_loss.1} parent=1 // pred_region
      _
    $region5: #{ntxent_loss.1} parent=1 // pred_fallthru
      _
    // Predicated region
    $region6: #{ntxent_loss.1} parent=1 // pred_check
      _
    $region7: #{ntxent_loss.1} parent=1 // pred_check_branch
      %12 = sbr.rel (0) target = $region9
    $region8: #{ntxent_loss.1} parent=1 // pred_region
      _
    $region9: #{ntxent_loss.1} parent=1 // pred_fallthru
      _
    // Predicated region
    $region10: #{ntxent_loss.1} parent=1 // pred_check
      _
    $region11: #{ntxent_loss.1} parent=1 // pred_check_branch
      %14 = sbr.rel (0) target = $region13
    $region12: #{ntxent_loss.1} parent=1 // pred_region
      _
    $region13: #{ntxent_loss.1} parent=1 // pred_fallthru
      _
    %v15 = vld [vmem:[%s0] sm:$0xff]
    %v16 = vld [vmem:[%s1] sm:$0xff]
    %v17 = vld [vmem:[%s2] sm:$0xff]
    %v18 = vmul.f32 %v15, 2.0
    %vm19 = vcmask 261120
    %v21 = vsel %vm19, %v18, 0
    %v24 = vsel %vm19, %v17, 0
    %26 = vmatprep.subr.mxu0 0.0
    %27 = vmatpush1.xpose.msra.mxu0 %v24
    %28 = vmatprep.subr.mxu0 0.0
    %29 = vmatpush1.xpose.msra.mxu0 0.0
    %30 = vmatprep.subr.mxu0 0.0
    %31 = vmatpush1.xpose.msra.mxu0 0.0
    %32 = vmatprep.subr.mxu0 0.0
    %33 = vmatpush1.xpose.msra.mxu0 0.0
    %34 = vmatprep.subr.mxu0 0.0
    %35 = vmatpush1.xpose.msra.mxu0 0.0
    %36 = vmatprep.subr.mxu0 0.0
    %37 = vmatpush1.xpose.msra.mxu0 0.0
    %38 = vmatprep.subr.mxu0 0.0
    %39 = vmatpush1.xpose.msra.mxu0 0.0
    %40 = vmatprep.subr.mxu0 0.0
    %41 = vmatpush1.xpose.msra.mxu0 0.0
    %42 = vmatprep.subr.mxu0 0.0
    %43 = vmatpush1.xpose.msra.mxu0 0.0
    %44 = vmatprep.subr.mxu0 0.0
    %45 = vmatpush1.xpose.msra.mxu0 0.0
    %46 = vmatprep.subr.mxu0 0.0
    %47 = vmatpush1.xpose.msra.mxu0 0.0
    %48 = vmatprep.subr.mxu0 0.0
    %49 = vmatpush1.xpose.msra.mxu0 0.0
    %50 = vmatprep.subr.mxu0 0.0
    %51 = vmatpush1.xpose.msra.mxu0 0.0
    %52 = vmatprep.subr.mxu0 0.0
    %53 = vmatpush1.xpose.msra.mxu0 0.0
    %54 = vmatprep.subr.mxu0 0.0
    %55 = vmatpush1.xpose.msra.mxu0 0.0
    %56 = vmatprep.subr.mxu0 0.0
    %57 = vmatpush1.xpose.msra.mxu0 0.0
    %58 = vmatprep.subr.mxu0 0.0
    %59 = vmatpush1.xpose.msra.mxu0 0.0
    %60 = vmatprep.subr.mxu0 0.0
    %61 = vmatpush1.xpose.msra.mxu0 0.0
    %62 = vmatprep.subr.mxu0 0.0
    %63 = vmatpush1.xpose.msra.mxu0 0.0
    %64 = vmatprep.subr.mxu0 0.0
    %65 = vmatpush1.xpose.msra.mxu0 0.0
    %66 = vmatprep.subr.mxu0 0.0
    %67 = vmatpush1.xpose.msra.mxu0 0.0
    %68 = vmatprep.subr.mxu0 0.0
    %69 = vmatpush1.xpose.msra.mxu0 0.0
    %70 = vmatprep.subr.mxu0 0.0
    %71 = vmatpush1.xpose.msra.mxu0 0.0
    %72 = vmatprep.subr.mxu0 0.0
    %73 = vmatpush1.xpose.msra.mxu0 0.0
    %74 = vmatprep.subr.mxu0 0.0
    %75 = vmatpush1.xpose.msra.mxu0 0.0
    %76 = vmatprep.subr.mxu0 0.0
    %77 = vmatpush1.xpose.msra.mxu0 0.0
    %78 = vmatprep.subr.mxu0 0.0
    %79 = vmatpush1.xpose.msra.mxu0 0.0
    %80 = vmatprep.subr.mxu0 0.0
    %81 = vmatpush1.xpose.msra.mxu0 0.0
    %82 = vmatprep.subr.mxu0 0.0
    %83 = vmatpush1.xpose.msra.mxu0 0.0
    %84 = vmatprep.subr.mxu0 0.0
    %85 = vmatpush1.xpose.msra.mxu0 0.0
    %86 = vmatprep.subr.mxu0 0.0
    %87 = vmatpush1.xpose.msra.mxu0 0.0
    %88 = vmatprep.subr.mxu0 0.0
    %89 = vmatpush1.xpose.msra.mxu0 0.0
    %90 = vmatprep.mubr.f32.mxu0 0.0
    %91 = vmatmul.mubr.f32.gmra.mrb[0].mxu0 %v21
    %v92 = vpop.f32.mrb[0].mxu0
    %v93 = vadd.f32 0.0, %v92
    %v94 = vpop.f32.mrb[0].mxu0
    %95 = vdwg.mxu0
    %v96 = vmul.f32 %v15, %v16
    %v97 = vsel %vm19, %v96, 0.0
    %98 = vadd.xlane.f32.xlu0 %v97
    %v99 = vpop.xlane.xlu0 %98
    %v100 = vmul.f32 %v99, 2.0
    %s101 = smul.u32 0, 8
    %v102 = vlaneseq
    %v103 = vshrl.u32 %v102, 7
    %v104 = vstv %s101
    %v105 = vadd.s32 %v104, %v103
    %v106 = vlaneseq
    %v107 = vand.u32 %v106, 127
    %vm108 = vcmp.eq.s32.totalorder %v107, %v105
    %v109 = vsel %vm108, -1e+30, %v93
    %vm110 = vcmask 64512
    %v111 = vsel %vm110, %v109, -inf
    %112 = vmax.xlane.f32.xlu0 %v111
    %v113 = vpop.xlane.xlu0 %112
    %v114 = vsub.f32 %v109, %v113
    %v115 = vmul.f32 %v114, 1.442695
    %v116 = vpow.pop %v115
    %v117 = vsel %vm110, %v116, 0.0
    %118 = vadd.xlane.f32.xlu0 %v117
    %v119 = vpop.xlane.xlu0 %118
    %v120 = vlog2.pop %v119
    %v121 = vmul.f32 %v120, 0.6931472
    %v122 = vadd.f32 %v113, %v121
    %v123 = vsub.f32 %v122, %v100
    %vm124 = vcmask 7168
    %v125 = vsel %vm124, %v123, 0.0
    %126 = vadd.xlane.f32.xlu0 %v125
    %v127 = vpop.xlane.xlu0 %126
    %v128 = vrot.slane %v127, 4
    %v129 = vadd.f32 %v127, %v128
    %v130 = vrot.slane %v129, 2
    %v131 = vadd.f32 %v129, %v130
    %v132 = vrot.slane %v131, 1
    %v133 = vadd.f32 %v131, %v132
    %s134 = vtos %v133
    %v135 = vstv %s134
    %vm136 = vcmask 0
    %137 = vst.msk [vmem:[#allocation2] sm:$0x1] %vm136, %v135
    // Predicated region
    $region14: #{ntxent_loss.1} parent=1 // pred_check
      _
    $region15: #{ntxent_loss.1} parent=1 // pred_check_branch
      %139 = sbr.rel (0) target = $region17
    $region16: #{ntxent_loss.1} parent=1 // pred_region
      %s141 = ssub.s32 16, 16
      %142 = vsyncadd [#allocation3], %s141
      %s144 = sshll.u32 [#allocation2], 4
      %s145 = int_to_ptr.vmem [resolvable:$true] %s144
      %147 = dma.vmem_to_hbm [thread:$0]  %s145, 16, %s3, [#allocation3]
    $region17: #{ntxent_loss.1} parent=1 // pred_fallthru
      _
    // Predicated region
    $region18: #{ntxent_loss.1} parent=1 // pred_check
      _
    $region19: #{ntxent_loss.1} parent=1 // pred_check_branch
      %149 = sbr.rel (0) target = $region21
    $region20: #{ntxent_loss.1} parent=1 // pred_region
      %150 = dma.done [#allocation3], 16
    $region21: #{ntxent_loss.1} parent=1 // pred_fallthru
      _
    %151 = vsyncpa [#allocation3], 1

</llo_original>
